<compile_context>
chip_gen: v7x
topology: tpu7x:2x2x1
jax: 0.10.0
libtpu: 0.0.40
codegen_flags: <defaults>
</compile_context>

<pallas_src>
import jax
import jax.numpy as jnp
from jax.experimental import pallas as pl
from jax.experimental.pallas import tpu as pltpu

_LANES = 128
_ROW_ALIGN = 32  # lcm of sublane packing for f32 (8), bf16 (16), int8 (32)


def _round_up(x, m):
    return ((x + m - 1) // m) * m


def _nll_sum_kernel(pred_ref, hit_ref, num_ref, nacc):
    """Accumulates per-lane sums of pred[i, target[i]] along the 'arbitrary' axis."""
    t = pl.program_id(1)

    @pl.when(t == 0)
    def _():
        nacc[...] = jnp.zeros_like(nacc)

    pred = pred_ref[...].astype(jnp.float32)   # (TR, 128) lane-dense log-probs
    hit = hit_ref[...] != 0                    # (TR, 128) bool from int8 hit mask
    # Mask, don't multiply: avoids 0 * (-inf) = NaN from log_softmax underflow.
    nacc[...] += jnp.sum(jnp.where(hit, pred, 0.0), axis=0, keepdims=True)

    @pl.when(t == pl.num_programs(1) - 1)
    def _():
        num_ref[...] = nacc[...]


def _nll_sum_count_kernel(pred_ref, hit_ref, num_ref, cnt_ref, nacc, cacc):
    """Per-lane masked pred sums + per-lane hit counts (class weights applied in wrapper)."""
    t = pl.program_id(1)

    @pl.when(t == 0)
    def _():
        nacc[...] = jnp.zeros_like(nacc)
        cacc[...] = jnp.zeros_like(cacc)

    pred = pred_ref[...].astype(jnp.float32)
    hit = hit_ref[...] != 0
    nacc[...] += jnp.sum(jnp.where(hit, pred, 0.0), axis=0, keepdims=True)
    cacc[...] += jnp.sum(jnp.where(hit, 1.0, 0.0), axis=0, keepdims=True)

    @pl.when(t == pl.num_programs(1) - 1)
    def _():
        num_ref[...] = nacc[...]
        cnt_ref[...] = cacc[...]


def _default_parallel_chunks():
    """2 chunks only on chips where the 'parallel' axis shards across 2 TensorCores."""
    try:
        kind = (jax.devices()[0].device_kind or "").lower()
    except Exception:
        return 1
    if "v7" in kind or "v5p" in kind or "v4" in kind:
        return 2
    return 1  # v5e / v6e: single TensorCore, parallel split is just a serial loop


def _nll_loss_xla(pred, target, weight):
    """Plain XLA path for small N (Pallas launch + slab build would dominate)."""
    pred = pred.astype(jnp.float32)
    tgt = target.astype(jnp.int32)
    picked = jnp.take_along_axis(pred, tgt[:, None], axis=1)[:, 0]
    if weight is None:
        return -jnp.mean(picked)
    wt = jnp.take(jnp.asarray(weight, jnp.float32).reshape(-1), tgt)
    return -(jnp.sum(wt * picked) / jnp.sum(wt))


def nll_loss_pallas(pred, target, weight=None, *, tile_rows=8192, parallel_chunks=None,
                    min_points_for_pallas=65536, cast_pred_to_bf16=False):
    """pred: (N, C) float log-probs; target: (N,) int; weight: (C,) or None."""
    N, C = pred.shape
    if C > _LANES:
        # TODO(synk): general C > 128 would need a class-tiled reduction path.
        raise NotImplementedError("nll_loss_pallas supports num_classes <= 128")

    if N < min_points_for_pallas:
        return _nll_loss_xla(pred, target, weight)

    # Pad classes to a power of two (>= 2) so class slots tile the 128-lane vreg.
    cp = max(2, 1 << (C - 1).bit_length())
    pts_per_row = _LANES // cp

    p = parallel_chunks if parallel_chunks is not None else _default_parallel_chunks()
    p = max(1, int(p))

    rows = pl.cdiv(N, pts_per_row)
    tile_rows = _round_up(max(_ROW_ALIGN, int(tile_rows)), _ROW_ALIGN)
    tr0 = min(tile_rows, _round_up(pl.cdiv(rows, p), _ROW_ALIGN))
    steps = pl.cdiv(rows, p * tr0)
    # Re-tighten the tile after fixing the step count so padding overshoot is tiny.
    tr = _round_up(pl.cdiv(rows, p * steps), _ROW_ALIGN)
    rows_padded = p * steps * tr
    n_padded = rows_padded * pts_per_row

    slab_dtype = jnp.bfloat16 if cast_pred_to_bf16 else jnp.float32

    # pred slab: one fused pad (classes + rows), then a free row-major reshape.
    pred_slab = pred.astype(slab_dtype)
    if n_padded != N or cp != C:
        pred_slab = jnp.pad(pred_slab, ((0, n_padded - N), (0, cp - C)))
    pred_slab = pred_slab.reshape(rows_padded, _LANES)

    # int8 hit mask: hit[i, c] = (target[i] == c), built with a single broadcasted
    # compare (no int32 repeat materialization). Padded rows use target = -1 so they
    # never match. Both slabs come from the SAME row-major reshape of an (n_padded, cp)
    # array, so point<->mask alignment holds by construction.
    tgt = target.astype(jnp.int32).reshape(N)
    if n_padded != N:
        tgt = jnp.pad(tgt, (0, n_padded - N), constant_values=-1)
    hit_slab = (tgt[:, None] == jnp.arange(cp, dtype=jnp.int32)[None, :]
                ).astype(jnp.int8).reshape(rows_padded, _LANES)

    grid = (p, steps)
    data_spec = pl.BlockSpec((tr, _LANES), lambda pi, ti: (pi * steps + ti, 0))
    # Lane-dense partial output: one 128-lane block per parallel chunk.
    out_spec = pl.BlockSpec((1, _LANES), lambda pi, ti: (0, pi))
    out_shape = jax.ShapeDtypeStruct((1, p * _LANES), jnp.float32)
    cparams = pltpu.CompilerParams(
        dimension_semantics=("parallel", "arbitrary"),
    )

    if weight is None:
        num = pl.pallas_call(
            _nll_sum_kernel,
            out_shape=out_shape,
            grid_spec=pltpu.PrefetchScalarGridSpec(
                num_scalar_prefetch=0,
                grid=grid,
                in_specs=[data_spec, data_spec],
                out_specs=out_spec,
                scratch_shapes=[pltpu.VMEM((1, _LANES), jnp.float32)],
            ),
            compiler_params=cparams,
        )(pred_slab, hit_slab)
        return -jnp.sum(num) / jnp.float32(N)

    num, cnt = pl.pallas_call(
        _nll_sum_count_kernel,
        out_shape=(out_shape, out_shape),
        grid_spec=pltpu.PrefetchScalarGridSpec(
            num_scalar_prefetch=0,
            grid=grid,
            in_specs=[data_spec, data_spec],
            out_specs=(out_spec, out_spec),
            scratch_shapes=[
                pltpu.VMEM((1, _LANES), jnp.float32),
                pltpu.VMEM((1, _LANES), jnp.float32),
            ],
        ),
        compiler_params=cparams,
    )(pred_slab, hit_slab)

    # Apply class weights once, per lane, on the tiny (1, p*128) partials.
    w = jnp.asarray(weight, jnp.float32).reshape(C)
    if cp != C:
        w = jnp.pad(w, (0, cp - C))
    w_lane = jnp.tile(w, pts_per_row)                      # (128,): w_lane[l] = w[l % cp]
    num_w = jnp.sum(num.reshape(p, _LANES) * w_lane)
    den_w = jnp.sum(cnt.reshape(p, _LANES) * w_lane)
    # NOTE: den_w == 0 only if every target were padding; matches nll_loss nan semantics.
    return -num_w / den_w


def get_loss_forward(pred, target, trans_feat, weight=None):
    """Mirrors get_loss.forward; trans_feat is unused (as in the PyTorch module)."""
    del trans_feat
    return nll_loss_pallas(pred, target, weight)


if __name__ == "__main__":
    key = jax.random.PRNGKey(0)
    k1, k2, k3, k4, k5 = jax.random.split(key, 5)

    def ref_nll(pred, target, weight=None):
        picked = pred[jnp.arange(pred.shape[0]), target]
        if weight is None:
            return -jnp.mean(picked)
        wt = weight[target]
        return -(jnp.sum(wt * picked) / jnp.sum(wt))

    # ---- Case A: module-natural tiny shapes (B=2, 64 points, 2 classes) ----
    B, NPTS, C = 2, 64, 2
    N = B * NPTS
    pred = jax.nn.log_softmax(jax.random.normal(k1, (N, C), jnp.float32), axis=-1)
    target = jax.random.randint(k2, (N,), 0, C, dtype=jnp.int32)
    trans_feat = jax.random.normal(k3, (B, 16, 16), jnp.float32)  # unused, as in the module
    weight = jnp.array([0.3, 0.7], jnp.float32)

    # Force the Pallas kernel (default wrapper routes tiny N to plain XLA).
    loss_u = jax.block_until_ready(
        nll_loss_pallas(pred, target, None, min_points_for_pallas=0))
    ref_u = ref_nll(pred, target)
    assert jnp.allclose(loss_u, ref_u, rtol=1e-5, atol=1e-6), (loss_u, ref_u)

    loss_w = jax.block_until_ready(
        nll_loss_pallas(pred, target, weight, min_points_for_pallas=0))
    ref_w = ref_nll(pred, target, weight)
    assert jnp.allclose(loss_w, ref_w, rtol=1e-5, atol=1e-6), (loss_w, ref_w)

    # Module-facing wrapper (tiny N takes the XLA fast path by design).
    loss_fw = jax.block_until_ready(get_loss_forward(pred, target, trans_feat))
    assert jnp.allclose(loss_fw, ref_u, rtol=1e-5, atol=1e-6), (loss_fw, ref_u)
    loss_fww = jax.block_until_ready(get_loss_forward(pred, target, trans_feat, weight))
    assert jnp.allclose(loss_fww, ref_w, rtol=1e-5, atol=1e-6), (loss_fww, ref_w)

    # ---- Case B: ragged N, multi-step grid, 2 parallel chunks ----
    N2 = 2 * 4000
    pred2 = jax.nn.log_softmax(jax.random.normal(k4, (N2, C), jnp.float32), axis=-1)
    target2 = jax.random.randint(k5, (N2,), 0, C, dtype=jnp.int32)

    loss2_u = jax.block_until_ready(
        nll_loss_pallas(pred2, target2, None, tile_rows=32, parallel_chunks=2,
                        min_points_for_pallas=0))
    ref2_u = ref_nll(pred2, target2)
    assert jnp.allclose(loss2_u, ref2_u, rtol=1e-4, atol=1e-6), (loss2_u, ref2_u)

    loss2_w = jax.block_until_ready(
        nll_loss_pallas(pred2, target2, weight, tile_rows=32, parallel_chunks=2,
                        min_points_for_pallas=0))
    ref2_w = ref_nll(pred2, target2, weight)
    assert jnp.allclose(loss2_w, ref2_w, rtol=1e-4, atol=1e-6), (loss2_w, ref2_w)

    print("KERNEL_OK")
</pallas_src>

<mosaic_0001>
module attributes {stable_mosaic.version = 11 : i64} {
  func.func @_nll_sum_kernel(%arg0: i32, %arg1: i32, %arg2: memref<32x128xf32, #tpu.memory_space<vmem>>, %arg3: memref<32x128xi8, #tpu.memory_space<vmem>>, %arg4: memref<1x128xf32, #tpu.memory_space<vmem>>, %arg5: memref<1x128xf32, #tpu.memory_space<vmem>>) attributes {dimension_semantics = [#tpu.dimension_semantics<parallel>, #tpu.dimension_semantics<arbitrary>], iteration_bounds = array<i64: 1, 1>, scalar_prefetch = 0 : i64, scratch_operands = 1 : i64, tpu.core_type = #tpu.core_type<tc>, window_params = [{transform_indices = @transform_0, window_bounds = array<i64: 32, 128>}, {transform_indices = @transform_1, window_bounds = array<i64: 32, 128>}, {transform_indices = @transform_2, window_bounds = array<i64: 1, 128>}]} {
    %c0_i32 = arith.constant 0 : i32
    %0 = arith.cmpi eq, %arg1, %c0_i32 : i32
    %1 = arith.extui %0 : i1 to i32
    %c0_i32_0 = arith.constant 0 : i32
    %2 = arith.cmpi ne, %1, %c0_i32_0 : i32
    scf.if %2 {
      %cst_11 = arith.constant 0.000000e+00 : f32
      %17 = vector.broadcast %cst_11 : f32 to vector<1x128xf32>
      %c0_12 = arith.constant 0 : index
      %c0_13 = arith.constant 0 : index
      %18 = vector.load %arg5[%c0_12, %c0_13] : memref<1x128xf32, #tpu.memory_space<vmem>>, vector<1x128xf32>
      tpu.vector_store %arg5[%c0_12, %c0_13], %17 {strides = array<i32>} : memref<1x128xf32, #tpu.memory_space<vmem>>, vector<1x128xf32>,
    } else {
    }
    %c0 = arith.constant 0 : index
    %c0_1 = arith.constant 0 : index
    %3 = vector.load %arg2[%c0, %c0_1] : memref<32x128xf32, #tpu.memory_space<vmem>>, vector<32x128xf32>
    %c0_2 = arith.constant 0 : index
    %c0_3 = arith.constant 0 : index
    %4 = vector.load %arg3[%c0_2, %c0_3] : memref<32x128xi8, #tpu.memory_space<vmem>>, vector<32x128xi8>
    %c0_i8 = arith.constant 0 : i8
    %5 = vector.broadcast %c0_i8 : i8 to vector<32x128xi8>
    %6 = arith.cmpi ne, %4, %5 : vector<32x128xi8>
    %c0_4 = arith.constant 0 : index
    %c0_5 = arith.constant 0 : index
    %7 = vector.load %arg5[%c0_4, %c0_5] : memref<1x128xf32, #tpu.memory_space<vmem>>, vector<1x128xf32>
    %cst = arith.constant 0.000000e+00 : f32
    %8 = vector.broadcast %cst : f32 to vector<32x128xf32>
    %9 = arith.select %6, %3, %8 : vector<32x128xi1>, vector<32x128xf32>
    %cst_6 = arith.constant dense<0.000000e+00> : vector<128xf32>
    %10 = vector.multi_reduction <add>, %9, %cst_6 [0] : vector<32x128xf32> to vector<128xf32>
    %11 = vector.shape_cast %10 : vector<128xf32> to vector<1x128xf32>
    %12 = arith.addf %7, %11 : vector<1x128xf32>
    %c0_7 = arith.constant 0 : index
    %c0_8 = arith.constant 0 : index
    %13 = vector.load %arg5[%c0_7, %c0_8] : memref<1x128xf32, #tpu.memory_space<vmem>>, vector<1x128xf32>
    tpu.vector_store %arg5[%c0_7, %c0_8], %12 {strides = array<i32>} : memref<1x128xf32, #tpu.memory_space<vmem>>, vector<1x128xf32>,
    %c0_i32_9 = arith.constant 0 : i32
    %14 = arith.cmpi eq, %arg1, %c0_i32_9 : i32
    %15 = arith.extui %14 : i1 to i32
    %c0_i32_10 = arith.constant 0 : i32
    %16 = arith.cmpi ne, %15, %c0_i32_10 : i32
    scf.if %16 {
      %c0_11 = arith.constant 0 : index
      %c0_12 = arith.constant 0 : index
      %17 = vector.load %arg5[%c0_11, %c0_12] : memref<1x128xf32, #tpu.memory_space<vmem>>, vector<1x128xf32>
      %c0_13 = arith.constant 0 : index
      %c0_14 = arith.constant 0 : index
      %18 = vector.load %arg4[%c0_13, %c0_14] : memref<1x128xf32, #tpu.memory_space<vmem>>, vector<1x128xf32>
      tpu.vector_store %arg4[%c0_13, %c0_14], %17 {strides = array<i32>} : memref<1x128xf32, #tpu.memory_space<vmem>>, vector<1x128xf32>,
    } else {
    }
    return
  }
  func.func @transform_0(%arg0: i32, %arg1: i32) -> (i32, i32) {
    %c1_i32 = arith.constant 1 : i32
    %0 = arith.muli %arg0, %c1_i32 : i32
    %1 = arith.addi %0, %arg1 : i32
    %c0_i32 = arith.constant 0 : i32
    %c0_i32_0 = arith.constant 0 : i32
    return %1, %c0_i32 : i32, i32
  }
  func.func @transform_1(%arg0: i32, %arg1: i32) -> (i32, i32) {
    %c1_i32 = arith.constant 1 : i32
    %0 = arith.muli %arg0, %c1_i32 : i32
    %1 = arith.addi %0, %arg1 : i32
    %c0_i32 = arith.constant 0 : i32
    %c0_i32_0 = arith.constant 0 : i32
    return %1, %c0_i32 : i32, i32
  }
  func.func @transform_2(%arg0: i32, %arg1: i32) -> (i32, i32) {
    %c0_i32 = arith.constant 0 : i32
    %c0_i32_0 = arith.constant 0 : i32
    return %c0_i32, %arg0 : i32, i32
  }
}

</mosaic_0001>

<llo_original>
// kernel: tpu_custom_call.1
$region0: #{tpu_custom_call.1}
  #allocation0 [shape = 'u32[]', space=smem, size = 0x4, offset = 0x4, fixed_abs, tag = 'smem constant byte address 0x4 - core index']
  #allocation1 [shape = 'u32[144,128]{1,0:T(1,128)}', space=vmem, size = 0x12000, scoped, tag = 'internal scratch']
  #allocation2 [shape = 'f32[1,128]{1,0:T(1,128)}', space=vmem, size = 0x200, scoped, tag = 'scratch operand']
  %s0 = inlined_call_operand.hbm [shape: f32[32,128], index: 0, kind: input, shape index: {}]
  %s1 = inlined_call_operand.hbm [shape: s8[32,128], index: 1, kind: input, shape index: {}]
  %s2 = inlined_call_operand.hbm [shape: f32[1,128], index: 2, kind: output, shape index: {}]
  %s3 = sld [smem:[#allocation0]]
  $region34: #{tpu_custom_call.1} parent=0
    _
  %s5 = ssub.s32 1, %s3
  %s6 = scalar_select 0, %s5, %s3
  $region1: #{tpu_custom_call.1} parent=0
    #allocation3 [shape = 'u8[16384]{0}', space=vmem, size = 0x4000, scoped, tag = 'input window, operand 0, single buffered']
    #allocation4 [shape = 's32[1]{0}', space=sflag, size = 0x4, scoped, tag = 'scoped memory for tpu_custom_call.1']
    #allocation5 [shape = 's32[1]{0}', space=sflag, size = 0x4, scoped, tag = 'scoped memory for tpu_custom_call.1']
    #allocation6 [shape = 'u8[4096]{0}', space=vmem, size = 0x1000, scoped, tag = 'input window, operand 1, single buffered']
    #allocation7 [shape = 's32[1]{0}', space=sflag, size = 0x4, scoped, tag = 'scoped memory for tpu_custom_call.1']
    #allocation8 [shape = 'u8[512]{0}', space=vmem, size = 0x400, scoped, tag = 'output window, operand 0, single buffered']
    %7 = vsyncpa [#allocation4], 0
    %8 = vsyncpa [#allocation7], 0
    %9 = vsyncpa [#allocation5], 0
    // Predicated region
    $region2: #{tpu_custom_call.1} parent=1 // pred_check
      _
    $region3: #{tpu_custom_call.1} parent=1 // pred_check_branch
      %11 = sbr.rel (0) target = $region5
    $region4: #{tpu_custom_call.1} parent=1 // pred_region
      %s12 = sadd.s32 0, 0
      %s13 = smul.u32 4, %s12
      %s15 = ssub.s32 512, 512
      %16 = vsyncadd [#allocation4], %s15
      %s17 = smul.addr %s13, 128
      %s18 = scalar_lea.hbm %s0, %s17
      %s19 = sshll.u32 [#allocation3], 4
      %s20 = int_to_ptr.vmem [resolvable:$true] %s19
      %25 = dma.hbm_to_vmem [thread:$0]  %s18, 512, %s20, [#allocation4], 128, 128, 8
    $region5: #{tpu_custom_call.1} parent=1 // pred_fallthru
      _
    // Predicated region
    $region6: #{tpu_custom_call.1} parent=1 // pred_check
      _
    $region7: #{tpu_custom_call.1} parent=1 // pred_check_branch
      %27 = sbr.rel (0) target = $region9
    $region8: #{tpu_custom_call.1} parent=1 // pred_region
      %s28 = sadd.s32 0, 0
      %s30 = ssub.s32 128, 128
      %31 = vsyncadd [#allocation7], %s30
      %s32 = smul.addr %s28, 128
      %s33 = scalar_lea.hbm %s1, %s32
      %s35 = sshll.u32 [#allocation6], 4
      %s36 = int_to_ptr.vmem [resolvable:$true] %s35
      %38 = dma.hbm_to_vmem [thread:$0]  %s33, 128, %s36, [#allocation7]
    $region9: #{tpu_custom_call.1} parent=1 // pred_fallthru
      _
    // Predicated region
    $region10: #{tpu_custom_call.1} parent=1 // pred_check
      _
    $region11: #{tpu_custom_call.1} parent=1 // pred_check_branch
      %40 = sbr.rel (0) target = $region13
    $region12: #{tpu_custom_call.1} parent=1 // pred_region
      %41 = dma.done [#allocation4], 512
    $region13: #{tpu_custom_call.1} parent=1 // pred_fallthru
      _
    // Predicated region
    $region14: #{tpu_custom_call.1} parent=1 // pred_check
      _
    $region15: #{tpu_custom_call.1} parent=1 // pred_check_branch
      %43 = sbr.rel (0) target = $region17
    $region16: #{tpu_custom_call.1} parent=1 // pred_region
      %44 = dma.done [#allocation7], 128
    $region17: #{tpu_custom_call.1} parent=1 // pred_fallthru
      _
    %s45 = sadd.s32 0, 0
    %s46 = smul.u32 4, %s45
    %s47 = sadd.s32 0, 0
    %p50 = scmp.eq.s32.totalorder 0, 0
    // Predicated region
    $region18: #{tpu_custom_call.1} parent=1 // pred_check
      %p51 = pneg %p50
    $region19: #{tpu_custom_call.1} parent=1 // pred_check_branch
      %53 = sbr.rel (%p51) target = $region21
    $region20: #{tpu_custom_call.1} parent=1 // pred_region
      %54 = vst [vmem:[#allocation2] sm:$0x1] 0.0
    $region21: #{tpu_custom_call.1} parent=1 // pred_fallthru
      _
    %v55 = vld [vmem:[#allocation3] sm:$0xff]
    %v56 = vld [vmem:[#allocation3 + $0x8] sm:$0xff]
    %v57 = vld [vmem:[#allocation3 + $0x10] sm:$0xff]
    %v58 = vld [vmem:[#allocation3 + $0x18] sm:$0xff]
    %v59 = vld [vmem:[#allocation6] sm:$0xff]
    %vm60 = vnez %v59
    %v61 = vld [vmem:[#allocation2] sm:$0x1]
    %v62 = vsel %vm60, 16843009, 0
    %v63 = vunpack.c.0.s8 %v62
    %v64 = vunpack.c.1.s8 %v62
    %v65 = vunpack.c.2.s8 %v62
    %v66 = vunpack.c.3.s8 %v62
    %v67 = vpack.c.b16 %v63, %v63
    %v68 = vpack.c.b8 %v67, %v67
    %v69 = vpack.c.b16 %v64, %v64
    %v70 = vpack.c.b8 %v69, %v69
    %v71 = vpack.c.b16 %v65, %v65
    %v72 = vpack.c.b8 %v71, %v71
    %v73 = vpack.c.b16 %v66, %v66
    %v74 = vpack.c.b8 %v73, %v73
    %vm75 = vnez %v68
    %vm76 = vnez %v70
    %vm77 = vnez %v72
    %vm78 = vnez %v74
    %v79 = vsel %vm75, 16843009, 0
    %v80 = vsel %vm76, 16843009, 0
    %v81 = vsel %vm77, 16843009, 0
    %v82 = vsel %vm78, 16843009, 0
    %v83 = vunpack.c.0.s8 %v79
    %v84 = vunpack.c.0.s8 %v80
    %v85 = vunpack.c.0.s8 %v81
    %v86 = vunpack.c.0.s8 %v82
    %vm87 = vcmp.ne.s32.totalorder %v83, 0
    %vm88 = vcmp.ne.s32.totalorder %v84, 0
    %vm89 = vcmp.ne.s32.totalorder %v85, 0
    %vm90 = vcmp.ne.s32.totalorder %v86, 0
    %v91 = vsel %vm87, %v55, 0.0
    %v92 = vsel %vm88, %v56, 0.0
    %v93 = vsel %vm89, %v57, 0.0
    %v94 = vsel %vm90, %v58, 0.0
    %v95 = vadd.f32 %v91, %v92
    %v96 = vadd.f32 %v95, %v93
    %v97 = vadd.f32 %v96, %v94
    %v98 = vrot.slane %v97, 4
    %v99 = vadd.f32 %v97, %v98
    %v100 = vrot.slane %v99, 2
    %v101 = vadd.f32 %v99, %v100
    %v102 = vrot.slane %v101, 1
    %v103 = vadd.f32 %v101, %v102
    %v104 = vadd.f32 %v61, %v103
    %105 = vst [vmem:[#allocation2] sm:$0x1] %v104
    // Predicated region
    $region22: #{tpu_custom_call.1} parent=1 // pred_check
      %p106 = pneg %p50
    $region23: #{tpu_custom_call.1} parent=1 // pred_check_branch
      %108 = sbr.rel (%p106) target = $region25
    $region24: #{tpu_custom_call.1} parent=1 // pred_region
      %v109 = vld [vmem:[#allocation2] sm:$0x1]
      %110 = vst [vmem:[#allocation8] sm:$0x1] %v109
    $region25: #{tpu_custom_call.1} parent=1 // pred_fallthru
      _
    // Predicated region
    $region26: #{tpu_custom_call.1} parent=1 // pred_check
      _
    $region27: #{tpu_custom_call.1} parent=1 // pred_check_branch
      %112 = sbr.rel (0) target = $region29
    $region28: #{tpu_custom_call.1} parent=1 // pred_region
      %s114 = ssub.s32 16, 16
      %115 = vsyncadd [#allocation5], %s114
      %s117 = sshll.u32 [#allocation8], 4
      %s118 = int_to_ptr.vmem [resolvable:$true] %s117
      %120 = dma.vmem_to_hbm [thread:$0]  %s118, 16, %s2, [#allocation5]
    $region29: #{tpu_custom_call.1} parent=1 // pred_fallthru
      _
    // Predicated region
    $region30: #{tpu_custom_call.1} parent=1 // pred_check
      _
    $region31: #{tpu_custom_call.1} parent=1 // pred_check_branch
      %122 = sbr.rel (0) target = $region33
    $region32: #{tpu_custom_call.1} parent=1 // pred_region
      %123 = dma.done [#allocation5], 16
    $region33: #{tpu_custom_call.1} parent=1 // pred_fallthru
      _
    %124 = vsyncpa [#allocation4], 1
    %125 = vsyncpa [#allocation7], 1
    %126 = vsyncpa [#allocation5], 1

</llo_original>
